<compile_context>
chip_gen: v5e
topology: v5e:2x2
jax: 0.10.0
libtpu: 0.0.40
codegen_flags: <defaults>
</compile_context>

<pallas_src>
import functools

import jax
import jax.numpy as jnp
from jax.experimental import pallas as pl
from jax.experimental.pallas import tpu as pltpu


# ----------------------------------------------------------------------------
# Fused kernel: im2col-conv (3x3) + bias + ReLU + 1x1 conv + bias + Linear + bias.
# One invocation, everything resident in VMEM, exactly three MXU matmuls.
# ----------------------------------------------------------------------------
def _fused_forward_kernel(p_ref, w0b_ref, b0b_ref, w1b_ref, b1b_ref,
                          w2_ref, b2_ref, o_ref):
    # p_ref  : (N*27, Ho*Wo)  bf16  im2col patches, row order (n, dy, dx, cin)
    # w0b    : (N*16, N*27)   bf16  block-diagonal 3x3 conv weight
    # b0b    : (N*16, 1)      f32
    # w1b    : (8,    N*16)   bf16  block-diagonal 1x1 conv weight, rows padded to 8
    # b1b    : (8, 1)         f32   (padding rows are zero)
    # w2     : (Ho*Wo, F)     bf16  Linear weight (already W^T)
    # b2     : (1, F)         f32
    # o_ref  : (8, F)         f32   row n*3+c is image n / channel c; rows >= N*3 unused

    # 3x3 valid conv for ALL images at once: one K=N*27 MXU matmul, f32 accumulate,
    # bias + ReLU on the VPU in f32.
    h = jnp.dot(w0b_ref[...], p_ref[...], preferred_element_type=jnp.float32)
    h = jnp.maximum(h + b0b_ref[...], 0.0)                               # (N*16, Ho*Wo)

    # 1x1 conv == channel matmul; output rows form a full 8-sublane slab.
    y1 = jnp.dot(w1b_ref[...], h.astype(jnp.bfloat16),
                 preferred_element_type=jnp.float32) + b1b_ref[...]      # (8, Ho*Wo)

    # Flatten(-2,-1) is already the (row, Ho*Wo) layout; one Linear matmul for the
    # whole slab, then one dense unmasked (8, F) store.
    out = jnp.dot(y1.astype(jnp.bfloat16), w2_ref[...],
                  preferred_element_type=jnp.float32) + b2_ref[...]      # (8, F)
    o_ref[...] = out.astype(o_ref.dtype)


def _fused_forward(patches, w0b, b0b, w1b, b1b, w2_t, b2):
    c0, k0 = w0b.shape
    rows = w1b.shape[0]
    hw = patches.shape[1]
    f = w2_t.shape[1]

    flops = 2 * (c0 * k0 * hw + rows * c0 * hw + rows * hw * f)
    bytes_accessed = sum(int(a.size) * a.dtype.itemsize
                         for a in (patches, w0b, b0b, w1b, b1b, w2_t, b2))
    bytes_accessed += rows * f * 4

    vmem_spec = pl.BlockSpec(memory_space=pltpu.MemorySpace.VMEM)
    return pl.pallas_call(
        _fused_forward_kernel,
        out_shape=jax.ShapeDtypeStruct((rows, f), jnp.float32),
        in_specs=[vmem_spec] * 7,
        out_specs=vmem_spec,
        compiler_params=pltpu.CompilerParams(
            # Allow XLA to fuse the im2col slicing / kron / tile producers directly
            # into the kernel's input DMAs (no HBM round trip of the patch tensor).
            allow_input_fusion=[True] * 7),
        cost_estimate=pl.CostEstimate(
            flops=flops, transcendentals=0, bytes_accessed=bytes_accessed),
    )(patches, w0b, b0b, w1b, b1b, w2_t, b2)


# ----------------------------------------------------------------------------
# Wrapper: im2col patch extraction + block-diagonal weight prep (all tiny; the
# producers are eligible for input fusion into the pallas_call) + kernel.
# ----------------------------------------------------------------------------
def _im2col_nchw(x):
    # x: (N, Cin, H, W) -> (N*9*Cin, Ho*Wo), row order (n, dy, dx, cin),
    # column order row-major spatial (h*Wo + w) — matches torch Flatten.
    n, cin, h, w = x.shape
    ho, wo = h - 2, w - 2
    taps = [x[:, :, dy:dy + ho, dx:dx + wo]
            for dy in range(3) for dx in range(3)]       # each (N, Cin, Ho, Wo)
    p = jnp.stack(taps, axis=1)                          # (N, 9, Cin, Ho, Wo)
    return p.reshape(n * 9 * cin, ho * wo)


def sample_model_forward(x_nchw, params, pixel_width, pixel_height):
    w0t, b0, w1t, b1, w2_t, b2 = params
    n = x_nchw.shape[0]
    rows = 3 * n
    pad = (-rows) % 8                                    # pad slab to full sublanes

    # im2col patches for all images, stacked along rows, bf16 for the MXU.
    patches = _im2col_nchw(x_nchw).astype(jnp.bfloat16)  # (N*27, Ho*Wo)

    # Block-diagonal weights so ONE matmul per stage handles every image.
    eye = jnp.eye(n, dtype=w0t.dtype)
    w0b = jnp.kron(eye, w0t)                             # (N*16, N*27)
    w1b = jnp.kron(eye, w1t)                             # (N*3,  N*16)
    w1b = jnp.concatenate(
        [w1b, jnp.zeros((pad, w1b.shape[1]), w1b.dtype)], axis=0)       # (8, N*16)
    b0b = jnp.tile(b0, (n, 1))                           # (N*16, 1)
    b1b = jnp.concatenate(
        [jnp.tile(b1, (n, 1)), jnp.zeros((pad, 1), b1.dtype)], axis=0)  # (8, 1)

    out = _fused_forward(patches, w0b, b0b, w1b, b1b, w2_t, b2)  # (rows+pad, W*H)
    # Unflatten(dim=-1, [pixel_width, pixel_height]); drop the padding rows.
    return out[:rows].reshape(n, 3, pixel_width, pixel_height)


# ----------------------------------------------------------------------------
# Deterministic parameter init (PyTorch-style uniform(-1/sqrt(fan_in), ...)),
# weights stored bf16 (MXU-native), biases f32 (VPU path).
# ----------------------------------------------------------------------------
def init_params(key, pixel_width, pixel_height):
    k0, k1, k2, k3, k4, k5 = jax.random.split(key, 6)

    # layer0: Conv2d(3, 16, 3). HWIO weight (3,3,3,16) -> (16, 27), cols (dy,dx,cin).
    fan0 = 3 * 3 * 3
    bnd0 = 1.0 / jnp.sqrt(float(fan0))
    w0_hwio = jax.random.uniform(k0, (3, 3, 3, 16), jnp.float32, -bnd0, bnd0)
    w0t = w0_hwio.reshape(27, 16).T.astype(jnp.bfloat16)          # (16, 27)
    b0 = jax.random.uniform(k1, (16, 1), jnp.float32, -bnd0, bnd0)

    # layer1: Conv2d(16, 3, 1) -> channel matrix (16, 3), stored transposed.
    fan1 = 16
    bnd1 = 1.0 / jnp.sqrt(float(fan1))
    w1 = jax.random.uniform(k2, (16, 3), jnp.float32, -bnd1, bnd1)
    w1t = w1.T.astype(jnp.bfloat16)                               # (3, 16)
    b1 = jax.random.uniform(k3, (3, 1), jnp.float32, -bnd1, bnd1)

    # layer2: Linear((H-2)*(W-2) -> W*H), stored as (in, out) = W^T.
    in_f = (pixel_height - 2) * (pixel_width - 2)
    out_f = pixel_width * pixel_height
    bnd2 = 1.0 / jnp.sqrt(float(in_f))
    w2_t = jax.random.uniform(k4, (in_f, out_f), jnp.float32,
                              -bnd2, bnd2).astype(jnp.bfloat16)
    b2 = jax.random.uniform(k5, (1, out_f), jnp.float32, -bnd2, bnd2)

    return (w0t, b0, w1t, b1, w2_t, b2)


# ----------------------------------------------------------------------------
# Independent pure-JAX f32 reference (lax.conv, no im2col / block-diag sharing).
# ----------------------------------------------------------------------------
def reference_forward(x_nchw, params, pixel_width, pixel_height):
    w0t, b0, w1t, b1, w2_t, b2 = params
    x = x_nchw.astype(jnp.float32)
    n = x.shape[0]
    ho, wo = x.shape[2] - 2, x.shape[3] - 2

    w0_hwio = w0t.astype(jnp.float32).T.reshape(3, 3, 3, 16)      # (kh, kw, in, out)
    y0 = jax.lax.conv_general_dilated(
        x, w0_hwio, window_strides=(1, 1), padding="VALID",
        dimension_numbers=("NCHW", "HWIO", "NCHW"))
    y0 = jnp.maximum(y0 + b0.reshape(1, 16, 1, 1), 0.0)           # (N, 16, Ho, Wo)

    y1 = jnp.einsum("of,nfhw->nohw", w1t.astype(jnp.float32), y0) \
        + b1.reshape(1, 3, 1, 1)                                  # (N, 3, Ho, Wo)

    flat = y1.reshape(n, 3, ho * wo)                              # Flatten(-2, -1)
    out = flat @ w2_t.astype(jnp.float32) + b2                    # (N, 3, W*H)
    return out.reshape(n, 3, pixel_width, pixel_height)


if __name__ == "__main__":
    # Small shapes: pixel_width = pixel_height = 16, batch = 2, in_channels = 3.
    PIXEL_W, PIXEL_H = 16, 16
    key = jax.random.PRNGKey(0)
    kx, kp = jax.random.split(key)

    x = jax.random.normal(kx, (2, 3, PIXEL_H, PIXEL_W), jnp.float32)  # NCHW
    params = init_params(kp, PIXEL_W, PIXEL_H)

    fwd = jax.jit(functools.partial(sample_model_forward,
                                    pixel_width=PIXEL_W, pixel_height=PIXEL_H))
    out = jax.block_until_ready(fwd(x, params))

    assert out.shape == (2, 3, PIXEL_W, PIXEL_H), out.shape
    ref = reference_forward(x, params, PIXEL_W, PIXEL_H)
    # bf16 MXU inputs with f32 accumulation vs f32 reference -> relaxed tolerance.
    assert jnp.allclose(out, ref, atol=2e-2, rtol=2e-2), "mismatch vs reference"

    print("KERNEL_OK")
</pallas_src>

<mosaic_0001>
module attributes {stable_mosaic.version = 11 : i64} {
  func.func @_fused_forward_kernel(%arg0: memref<54x196xbf16, #tpu.memory_space<vmem>>, %arg1: memref<32x54xbf16, #tpu.memory_space<vmem>>, %arg2: memref<32x1xf32, #tpu.memory_space<vmem>>, %arg3: memref<8x32xbf16, #tpu.memory_space<vmem>>, %arg4: memref<8x1xf32, #tpu.memory_space<vmem>>, %arg5: memref<196x256xbf16, #tpu.memory_space<vmem>>, %arg6: memref<1x256xf32, #tpu.memory_space<vmem>>, %arg7: memref<8x256xf32, #tpu.memory_space<vmem>>) attributes {dimension_semantics = [], scalar_prefetch = 0 : i64, scratch_operands = 0 : i64, tpu.core_type = #tpu.core_type<tc>} {
    %c0 = arith.constant 0 : index
    %c0_0 = arith.constant 0 : index
    %0 = vector.load %arg1[%c0, %c0_0] : memref<32x54xbf16, #tpu.memory_space<vmem>>, vector<32x54xbf16>
    %c0_1 = arith.constant 0 : index
    %c0_2 = arith.constant 0 : index
    %1 = vector.load %arg0[%c0_1, %c0_2] : memref<54x196xbf16, #tpu.memory_space<vmem>>, vector<54x196xbf16>
    %cst = arith.constant dense<0.000000e+00> : vector<32x196xf32>
    %2 = tpu.matmul %0, %1, %cst {dimension_numbers = #tpu.dot_dimension_numbers<[1], [0], [0], [1], [0, 0, 1, 1], [], []>} : vector<32x54xbf16>, vector<54x196xbf16>, vector<32x196xf32> -> vector<32x196xf32>
    %c0_3 = arith.constant 0 : index
    %c0_4 = arith.constant 0 : index
    %3 = vector.load %arg2[%c0_3, %c0_4] : memref<32x1xf32, #tpu.memory_space<vmem>>, vector<32x1xf32>
    %4 = vector.broadcast %3 : vector<32x1xf32> to vector<32x196xf32>
    %5 = arith.addf %2, %4 : vector<32x196xf32>
    %cst_5 = arith.constant 0.000000e+00 : f32
    %6 = vector.broadcast %cst_5 : f32 to vector<32x196xf32>
    %7 = arith.maximumf %5, %6 : vector<32x196xf32>
    %c0_6 = arith.constant 0 : index
    %c0_7 = arith.constant 0 : index
    %8 = vector.load %arg3[%c0_6, %c0_7] : memref<8x32xbf16, #tpu.memory_space<vmem>>, vector<8x32xbf16>
    %9 = arith.truncf %7 : vector<32x196xf32> to vector<32x196xbf16>
    %cst_8 = arith.constant dense<0.000000e+00> : vector<8x196xf32>
    %10 = tpu.matmul %8, %9, %cst_8 {dimension_numbers = #tpu.dot_dimension_numbers<[1], [0], [0], [1], [0, 0, 1, 1], [], []>} : vector<8x32xbf16>, vector<32x196xbf16>, vector<8x196xf32> -> vector<8x196xf32>
    %c0_9 = arith.constant 0 : index
    %c0_10 = arith.constant 0 : index
    %11 = vector.load %arg4[%c0_9, %c0_10] : memref<8x1xf32, #tpu.memory_space<vmem>>, vector<8x1xf32>
    %12 = vector.broadcast %11 : vector<8x1xf32> to vector<8x196xf32>
    %13 = arith.addf %10, %12 : vector<8x196xf32>
    %14 = arith.truncf %13 : vector<8x196xf32> to vector<8x196xbf16>
    %c0_11 = arith.constant 0 : index
    %c0_12 = arith.constant 0 : index
    %15 = vector.load %arg5[%c0_11, %c0_12] : memref<196x256xbf16, #tpu.memory_space<vmem>>, vector<196x256xbf16>
    %cst_13 = arith.constant dense<0.000000e+00> : vector<8x256xf32>
    %16 = tpu.matmul %14, %15, %cst_13 {dimension_numbers = #tpu.dot_dimension_numbers<[1], [0], [0], [1], [0, 0, 1, 1], [], []>} : vector<8x196xbf16>, vector<196x256xbf16>, vector<8x256xf32> -> vector<8x256xf32>
    %c0_14 = arith.constant 0 : index
    %c0_15 = arith.constant 0 : index
    %17 = vector.load %arg6[%c0_14, %c0_15] : memref<1x256xf32, #tpu.memory_space<vmem>>, vector<1x256xf32>
    %18 = vector.broadcast %17 : vector<1x256xf32> to vector<8x256xf32>
    %19 = arith.addf %16, %18 : vector<8x256xf32>
    %c0_16 = arith.constant 0 : index
    %c0_17 = arith.constant 0 : index
    %20 = vector.load %arg7[%c0_16, %c0_17] : memref<8x256xf32, #tpu.memory_space<vmem>>, vector<8x256xf32>
    tpu.vector_store %arg7[%c0_16, %c0_17], %19 {strides = array<i32>} : memref<8x256xf32, #tpu.memory_space<vmem>>, vector<8x256xf32>,
    return
  }
}

</mosaic_0001>

<llo_original>
// kernel: sample_model_forward.2
$region0: #{sample_model_forward.2}
  #allocation0 [shape = 'u32[]', space=smem, size = 0x4, offset = 0x4, fixed_abs, tag = 'smem constant byte address 0x4 - core index']
  #allocation1 [shape = 'u32[72,128]{1,0:T(1,128)}', space=vmem, size = 0x9000, scoped, tag = 'internal scratch']
  #allocation2 [shape = 'u32[2048]{0}', space=vmem, size = 0x2000, scoped, tag = 'scoped memory for sample_model_forward.2']
  #allocation3 [shape = 'u32[2048]{0}', space=vmem, size = 0x2000, scoped, tag = 'scoped memory for sample_model_forward.2']
  #allocation4 [shape = 'u32[2048]{0}', space=vmem, size = 0x2000, scoped, tag = 'scoped memory for sample_model_forward.2']
  #allocation5 [shape = 'u32[2048]{0}', space=vmem, size = 0x2000, scoped, tag = 'scoped memory for sample_model_forward.2']
  #allocation6 [shape = 'u32[2048]{0}', space=vmem, size = 0x2000, scoped, tag = 'scoped memory for sample_model_forward.2']
  #allocation7 [shape = 'u32[2048]{0}', space=vmem, size = 0x2000, scoped, tag = 'scoped memory for sample_model_forward.2']
  #allocation8 [shape = 'u32[2048]{0}', space=vmem, size = 0x2000, scoped, tag = 'scoped memory for sample_model_forward.2']
  #allocation9 [shape = 'u32[2048]{0}', space=vmem, size = 0x2000, scoped, tag = 'scoped memory for sample_model_forward.2']
  #allocation10 [shape = 'u32[2048]{0}', space=vmem, size = 0x2000, scoped, tag = 'scoped memory for sample_model_forward.2']
  #allocation11 [shape = 'u32[2048]{0}', space=vmem, size = 0x2000, scoped, tag = 'scoped memory for sample_model_forward.2']
  %s0 = inlined_call_operand.vmem [shape: bf16[54,196], index: 0, kind: input, shape index: {}]
  %s1 = inlined_call_operand.vmem [shape: bf16[32,54], index: 1, kind: input, shape index: {}]
  %s2 = inlined_call_operand.vmem [shape: f32[32,1], index: 2, kind: input, shape index: {}]
  %s3 = inlined_call_operand.vmem [shape: bf16[196,256], index: 3, kind: input, shape index: {}]
  %s4 = inlined_call_operand.vmem [shape: f32[1,256], index: 4, kind: input, shape index: {}]
  %s5 = inlined_call_operand.vmem [shape: f32[6,1], index: 5, kind: input, shape index: {}]
  %s6 = inlined_call_operand.<no memory space> [shape: f32[], index: 6, kind: input, shape index: {}]
  %s7 = inlined_call_operand.vmem [shape: bf16[6,32], index: 7, kind: input, shape index: {}]
  %s8 = inlined_call_operand.<no memory space> [shape: bf16[], index: 8, kind: input, shape index: {}]
  %s9 = inlined_call_operand.vmem [shape: f32[8,256], index: 9, kind: output, shape index: {}]
  %s10 = sld [smem:[#allocation0]]
  $region38: #{sample_model_forward.2} parent=0
    _
  %s12 = ssub.s32 1, %s10
  %s13 = scalar_select 0, %s12, %s10
  %v14 = vstv %s8
  %v15 = vunpack.i.l.bf16 %v14
  %v17 = vunpack.i.h.bf16 %v14
  %v19 = vstv %s6
  $region1: #{sample_model_forward.2} parent=0
    #allocation12 [shape = 'u8[2048]{0}', space=vmem, size = 0x800, dematerialized = true, scoped, tag = 'FusionAdapter Buffer %fusion.11 = bf16[8,32]{1,0:T(8,128)(2,1)} fusion(%param_7.1, %param_8), kind=kLoop, calls=%fused_computation.21.clone, metadata={op_name="jit(sample_model_forward)/concatenate" stack_frame_id=15}']
    #allocation13 [shape = 'u8[4096]{0}', space=vmem, size = 0x1000, dematerialized = true, scoped, tag = 'FusionAdapter Buffer %fusion.10 = f32[8,1]{1,0:T(8,128)} fusion(%param_5.2, %param_6.2), kind=kLoop, calls=%fused_computation.20.clone, metadata={op_name="jit(sample_model_forward)/concatenate" stack_frame_id=18}']
    // Predicated region
    $region2: #{sample_model_forward.2} parent=1 // pred_check
      _
    $region3: #{sample_model_forward.2} parent=1 // pred_check_branch
      %21 = sbr.rel (0) target = $region5
    $region4: #{sample_model_forward.2} parent=1 // pred_region
      _
    $region5: #{sample_model_forward.2} parent=1 // pred_fallthru
      _
    // Predicated region
    $region6: #{sample_model_forward.2} parent=1 // pred_check
      _
    $region7: #{sample_model_forward.2} parent=1 // pred_check_branch
      %23 = sbr.rel (0) target = $region9
    $region8: #{sample_model_forward.2} parent=1 // pred_region
      _
    $region9: #{sample_model_forward.2} parent=1 // pred_fallthru
      _
    // Predicated region
    $region10: #{sample_model_forward.2} parent=1 // pred_check
      _
    $region11: #{sample_model_forward.2} parent=1 // pred_check_branch
      %25 = sbr.rel (0) target = $region13
    $region12: #{sample_model_forward.2} parent=1 // pred_region
      _
    $region13: #{sample_model_forward.2} parent=1 // pred_fallthru
      _
    // Predicated region
    $region14: #{sample_model_forward.2} parent=1 // pred_check
      _
    $region15: #{sample_model_forward.2} parent=1 // pred_check_branch
      %27 = sbr.rel (0) target = $region17
    $region16: #{sample_model_forward.2} parent=1 // pred_region
      _
    $region17: #{sample_model_forward.2} parent=1 // pred_fallthru
      _
    // Predicated region
    $region18: #{sample_model_forward.2} parent=1 // pred_check
      _
    $region19: #{sample_model_forward.2} parent=1 // pred_check_branch
      %29 = sbr.rel (0) target = $region21
    $region20: #{sample_model_forward.2} parent=1 // pred_region
      _
    $region21: #{sample_model_forward.2} parent=1 // pred_fallthru
      _
    // Predicated region
    $region22: #{sample_model_forward.2} parent=1 // pred_check
      _
    $region23: #{sample_model_forward.2} parent=1 // pred_check_branch
      %31 = sbr.rel (0) target = $region25
    $region24: #{sample_model_forward.2} parent=1 // pred_region
      _
    $region25: #{sample_model_forward.2} parent=1 // pred_fallthru
      _
    // Predicated region
    $region26: #{sample_model_forward.2} parent=1 // pred_check
      _
    $region27: #{sample_model_forward.2} parent=1 // pred_check_branch
      %33 = sbr.rel (0) target = $region29
    $region28: #{sample_model_forward.2} parent=1 // pred_region
      _
    $region29: #{sample_model_forward.2} parent=1 // pred_fallthru
      _
    %s35 = sor.u32 255, 127
    %s36 = sand.u32 %s35, 85
    %s37 = sshrl.u32 %s36, 1
    %s38 = sor.u32 %s36, %s37
    %s39 = sand.u32 51, %s38
    %s40 = sshrl.u32 %s39, 2
    %s41 = sor.u32 %s39, %s40
    %s42 = sand.u32 15, %s41
    %v43 = vld [vmem:[%s7] sm:%s42]
    %v44 = vunpack.c.l.bf16 %v43
    %v45 = vunpack.c.h.bf16 %v43
    %v46 = vlaneseq
    %v47 = vshrl.u32 %v46, 7
    %vm49 = vcmp.lt.s32.totalorder %v47, 6
    %v50 = vsel %vm49, %v44, %v15
    %v51 = vlaneseq
    %v52 = vand.u32 %v51, 127
    %vm54 = vcmp.lt.s32.totalorder %v52, 32
    %v55 = vsel %vm54, %v50, %v15
    %v56 = vpack.c.bf16 0.0, %v55
    %s58 = ssub.s32 16, 1
    %59 = vst [vmem:[#allocation12] sm:%s58] %v56
    %v60 = vld [vmem:[%s5] sm:$0x3f]
    %v61 = vlaneseq
    %v62 = vshrl.u32 %v61, 7
    %vm64 = vcmp.lt.s32.totalorder %v62, 6
    %v65 = vsel %vm64, %v60, %v19
    %v66 = vlaneseq
    %v67 = vand.u32 %v66, 127
    %vm69 = vcmp.lt.s32.totalorder %v67, 1
    %v70 = vsel %vm69, %v65, %v19
    %s72 = ssub.s32 256, 1
    %73 = vst [vmem:[#allocation13] sm:%s72] %v70
    %v75 = vld [vmem:[%s1] sm:$0xf]
    %v76 = vld [vmem:[%s1 + $0x4] sm:$0xf]
    %v77 = vld [vmem:[%s1 + $0x8] sm:$0xf]
    %v78 = vld [vmem:[%s1 + $0xc] sm:$0xf]
    %v79 = vld [vmem:[%s0] sm:$0xff]
    %v80 = vld [vmem:[%s0 + $0x8] sm:$0xff]
    %v81 = vld [vmem:[%s0 + $0x10] sm:$0xff]
    %v82 = vld [vmem:[%s0 + $0x18] sm:$0xff]
    %v83 = vld [vmem:[%s0 + $0x20] sm:$0xff]
    %v84 = vld [vmem:[%s0 + $0x28] sm:$0xff]
    %v85 = vld [vmem:[%s0 + $0x30] sm:$0x77]
    %v86 = vld [vmem:[%s2] sm:$0xff]
    %v87 = vld [vmem:[%s2 + $0x8] sm:$0xff]
    %v88 = vld [vmem:[%s2 + $0x10] sm:$0xff]
    %v89 = vld [vmem:[%s2 + $0x18] sm:$0xff]
    %91 = vset.pattern.permute.xlu0 0
    %92 = vperm.xlu0 %91, %v86
    %v93 = vpop.permute.xlu0 %92
    %96 = vset.pattern.permute.xlu0 0
    %97 = vperm.xlu0 %96, %v87
    %v98 = vpop.permute.xlu0 %97
    %101 = vset.pattern.permute.xlu0 0
    %102 = vperm.xlu0 %101, %v88
    %v103 = vpop.permute.xlu0 %102
    %106 = vset.pattern.permute.xlu0 0
    %107 = vperm.xlu0 %106, %v89
    %v108 = vpop.permute.xlu0 %107
    %v114 = vunpack.c.l.b16 %v75
    %v115 = vunpack.c.l.b16 %v76
    %v116 = vunpack.c.l.b16 %v77
    %v117 = vunpack.c.l.b16 %v78
    %v118 = vpack.c.b16 %v115, %v114
    %v119 = vpack.c.b16 %v117, %v116
    %v127 = vunpack.c.l.b16 %v79
    %v128 = vunpack.c.h.b16 %v79
    %v129 = vunpack.c.l.b16 %v80
    %v130 = vunpack.c.h.b16 %v80
    %v131 = vunpack.c.l.b16 %v81
    %v132 = vunpack.c.h.b16 %v81
    %v133 = vunpack.c.l.b16 %v82
    %v134 = vunpack.c.h.b16 %v82
    %v135 = vunpack.c.l.b16 %v83
    %v136 = vunpack.c.h.b16 %v83
    %v137 = vunpack.c.l.b16 %v84
    %v138 = vunpack.c.h.b16 %v84
    %v139 = vunpack.c.l.b16 %v85
    %v140 = vunpack.c.h.b16 %v85
    %v141 = vpack.c.b16 %v129, %v127
    %v142 = vpack.c.b16 %v130, %v128
    %v143 = vpack.c.b16 %v133, %v131
    %v144 = vpack.c.b16 %v134, %v132
    %v145 = vpack.c.b16 %v137, %v135
    %v146 = vpack.c.b16 %v138, %v136
    %v147 = vpack.c.b16 %v139, %v139
    %v148 = vpack.c.b16 %v140, %v140
    %vm155 = vcmask 441344
    %v157 = vsel %vm155, %v118, 0
    %v160 = vsel %vm155, %v119, 0
    %vm162 = vcmask 1042432
    %v164 = vsel %vm162, %v147, 0
    %v167 = vsel %vm162, %v148, 0
    %169 = vmatpush.bf16.msra.mxu0 0
    %170 = vmatpush.bf16.msra.mxu0 0
    %171 = vmatpush.bf16.msra.mxu0 0
    %172 = vmatpush.bf16.msra.mxu0 0
    %173 = vmatpush.bf16.msra.mxu0 %v164
    %174 = vmatpush.bf16.msra.mxu0 %v145
    %175 = vmatpush.bf16.msra.mxu0 %v143
    %176 = vmatpush.bf16.msra.mxu0 %v141
    %177 = vmatmul.bf16.gmra.mxu0 %v157
    %v178 = vpop.f32.mrf.mxu0
    %v179 = vadd.f32 %v93, %v178
    %v180 = vpop.f32.mrf.mxu0
    %v181 = vadd.f32 %v98, %v180
    %182 = vmatmul.bf16.gmra.mxu0 %v160
    %v183 = vpop.f32.mrf.mxu0
    %v184 = vadd.f32 %v103, %v183
    %v185 = vpop.f32.mrf.mxu0
    %v186 = vadd.f32 %v108, %v185
    %187 = vdwg.mxu0
    %188 = vmatpush.bf16.msra.mxu0 0
    %189 = vmatpush.bf16.msra.mxu0 0
    %190 = vmatpush.bf16.msra.mxu0 0
    %191 = vmatpush.bf16.msra.mxu0 0
    %192 = vmatpush.bf16.msra.mxu0 %v167
    %193 = vmatpush.bf16.msra.mxu0 %v146
    %194 = vmatpush.bf16.msra.mxu0 %v144
    %195 = vmatpush.bf16.msra.mxu0 %v142
    %196 = vmatmul.bf16.gmra.mxu0 %v157
    %v197 = vpop.f32.mrf.mxu0
    %v198 = vadd.f32 %v93, %v197
    %v199 = vpop.f32.mrf.mxu0
    %v200 = vadd.f32 %v98, %v199
    %201 = vmatmul.bf16.gmra.mxu0 %v160
    %v202 = vpop.f32.mrf.mxu0
    %v203 = vadd.f32 %v103, %v202
    %v204 = vpop.f32.mrf.mxu0
    %v205 = vadd.f32 %v108, %v204
    %206 = vdwg.mxu0
    %v207 = vmax.f32 %v179, 0.0
    %v208 = vmax.f32 %v198, 0.0
    %v209 = vmax.f32 %v181, 0.0
    %v210 = vmax.f32 %v200, 0.0
    %v211 = vmax.f32 %v184, 0.0
    %v212 = vmax.f32 %v203, 0.0
    %v213 = vmax.f32 %v186, 0.0
    %v214 = vmax.f32 %v205, 0.0
    %v215 = vld [vmem:[#allocation12] sm:$0xf]
    %v216 = vpack.c.bf16 %v209, %v207
    %v217 = vpack.c.bf16 %v210, %v208
    %v218 = vpack.c.bf16 %v213, %v211
    %v219 = vpack.c.bf16 %v214, %v212
    %v220 = vld [vmem:[#allocation13] sm:$0xff]
    %222 = vset.pattern.permute.xlu0 0
    %223 = vperm.xlu0 %222, %v220
    %v224 = vpop.permute.xlu0 %223
    %vm226 = vcmask 261120
    %v228 = vsel %vm226, %v215, 0
    %230 = vmatpush.bf16.msra.mxu0 0
    %231 = vmatpush.bf16.msra.mxu0 0
    %232 = vmatpush.bf16.msra.mxu0 0
    %233 = vmatpush.bf16.msra.mxu0 0
    %234 = vmatpush.bf16.msra.mxu0 0
    %235 = vmatpush.bf16.msra.mxu0 0
    %236 = vmatpush.bf16.msra.mxu0 %v218
    %237 = vmatpush.bf16.msra.mxu0 %v216
    %238 = vmatmul.bf16.gmra.mxu0 %v228
    %v239 = vpop.f32.mrf.mxu0
    %v240 = vadd.f32 %v224, %v239
    %v241 = vpop.f32.mrf.mxu0
    %242 = vdwg.mxu0
    %243 = vmatpush.bf16.msra.mxu0 0
    %244 = vmatpush.bf16.msra.mxu0 0
    %245 = vmatpush.bf16.msra.mxu0 0
    %246 = vmatpush.bf16.msra.mxu0 0
    %247 = vmatpush.bf16.msra.mxu0 0
    %248 = vmatpush.bf16.msra.mxu0 0
    %249 = vmatpush.bf16.msra.mxu0 %v219
    %250 = vmatpush.bf16.msra.mxu0 %v217
    %251 = vmatmul.bf16.gmra.mxu0 %v228
    %v252 = vpop.f32.mrf.mxu0
    %v253 = vadd.f32 %v224, %v252
    %v254 = vpop.f32.mrf.mxu0
    %255 = vdwg.mxu0
    %v256 = vpack.c.bf16 %v240, %v240
    %v257 = vpack.c.bf16 %v253, %v253
    %v258 = vld [vmem:[%s3] sm:$0xff]
    %v259 = vld [vmem:[%s3 + $0x8] sm:$0xff]
    %v260 = vld [vmem:[%s3 + $0x10] sm:$0xff]
    %v261 = vld [vmem:[%s3 + $0x18] sm:$0xff]
    %v262 = vld [vmem:[%s3 + $0x20] sm:$0xff]
    %v263 = vld [vmem:[%s3 + $0x28] sm:$0xff]
    %v264 = vld [vmem:[%s3 + $0x30] sm:$0xff]
    %v265 = vld [vmem:[%s3 + $0x38] sm:$0xff]
    %v266 = vld [vmem:[%s3 + $0x40] sm:$0xff]
    %v267 = vld [vmem:[%s3 + $0x48] sm:$0xff]
    %v268 = vld [vmem:[%s3 + $0x50] sm:$0xff]
    %v269 = vld [vmem:[%s3 + $0x58] sm:$0xff]
    %v270 = vld [vmem:[%s3 + $0x60] sm:$0xff]
    %v271 = vld [vmem:[%s3 + $0x68] sm:$0xff]
    %v272 = vld [vmem:[%s3 + $0x70] sm:$0xff]
    %v273 = vld [vmem:[%s3 + $0x78] sm:$0xff]
    %v274 = vld [vmem:[%s3 + $0x80] sm:$0xff]
    %v275 = vld [vmem:[%s3 + $0x88] sm:$0xff]
    %v276 = vld [vmem:[%s3 + $0x90] sm:$0xff]
    %v277 = vld [vmem:[%s3 + $0x98] sm:$0xff]
    %v278 = vld [vmem:[%s3 + $0xa0] sm:$0xff]
    %v279 = vld [vmem:[%s3 + $0xa8] sm:$0xff]
    %v280 = vld [vmem:[%s3 + $0xb0] sm:$0xff]
    %v281 = vld [vmem:[%s3 + $0xb8] sm:$0xff]
    %v282 = vld [vmem:[%s3 + $0xc0] sm:$0x33]
    %v283 = vld [vmem:[%s4] sm:$0x3]
    %v285 = vperm.slane %v283, 0
    %v286 = vperm.slane %v283, 1
    %v314 = vunpack.c.l.b16 %v258
    %v315 = vunpack.c.h.b16 %v258
    %v316 = vunpack.c.l.b16 %v259
    %v317 = vunpack.c.h.b16 %v259
    %v318 = vunpack.c.l.b16 %v260
    %v319 = vunpack.c.h.b16 %v260
    %v320 = vunpack.c.l.b16 %v261
    %v321 = vunpack.c.h.b16 %v261
    %v322 = vunpack.c.l.b16 %v262
    %v323 = vunpack.c.h.b16 %v262
    %v324 = vunpack.c.l.b16 %v263
    %v325 = vunpack.c.h.b16 %v263
    %v326 = vunpack.c.l.b16 %v264
    %v327 = vunpack.c.h.b16 %v264
    %v328 = vunpack.c.l.b16 %v265
    %v329 = vunpack.c.h.b16 %v265
    %v330 = vunpack.c.l.b16 %v266
    %v331 = vunpack.c.h.b16 %v266
    %v332 = vunpack.c.l.b16 %v267
    %v333 = vunpack.c.h.b16 %v267
    %v334 = vunpack.c.l.b16 %v268
    %v335 = vunpack.c.h.b16 %v268
    %v336 = vunpack.c.l.b16 %v269
    %v337 = vunpack.c.h.b16 %v269
    %v338 = vunpack.c.l.b16 %v270
    %v339 = vunpack.c.h.b16 %v270
    %v340 = vunpack.c.l.b16 %v271
    %v341 = vunpack.c.h.b16 %v271
    %v342 = vunpack.c.l.b16 %v272
    %v343 = vunpack.c.h.b16 %v272
    %v344 = vunpack.c.l.b16 %v273
    %v345 = vunpack.c.h.b16 %v273
    %v346 = vunpack.c.l.b16 %v274
    %v347 = vunpack.c.h.b16 %v274
    %v348 = vunpack.c.l.b16 %v275
    %v349 = vunpack.c.h.b16 %v275
    %v350 = vunpack.c.l.b16 %v276
    %v351 = vunpack.c.h.b16 %v276
    %v352 = vunpack.c.l.b16 %v277
    %v353 = vunpack.c.h.b16 %v277
    %v354 = vunpack.c.l.b16 %v278
    %v355 = vunpack.c.h.b16 %v278
    %v356 = vunpack.c.l.b16 %v279
    %v357 = vunpack.c.h.b16 %v279
    %v358 = vunpack.c.l.b16 %v280
    %v359 = vunpack.c.h.b16 %v280
    %v360 = vunpack.c.l.b16 %v281
    %v361 = vunpack.c.h.b16 %v281
    %v362 = vunpack.c.l.b16 %v282
    %v363 = vunpack.c.h.b16 %v282
    %v364 = vpack.c.b16 %v316, %v314
    %v365 = vpack.c.b16 %v317, %v315
    %v366 = vpack.c.b16 %v320, %v318
    %v367 = vpack.c.b16 %v321, %v319
    %v368 = vpack.c.b16 %v324, %v322
    %v369 = vpack.c.b16 %v325, %v323
    %v370 = vpack.c.b16 %v328, %v326
    %v371 = vpack.c.b16 %v329, %v327
    %v372 = vpack.c.b16 %v332, %v330
    %v373 = vpack.c.b16 %v333, %v331
    %v374 = vpack.c.b16 %v336, %v334
    %v375 = vpack.c.b16 %v337, %v335
    %v376 = vpack.c.b16 %v340, %v338
    %v377 = vpack.c.b16 %v341, %v339
    %v378 = vpack.c.b16 %v344, %v342
    %v379 = vpack.c.b16 %v345, %v343
    %v380 = vpack.c.b16 %v348, %v346
    %v381 = vpack.c.b16 %v349, %v347
    %v382 = vpack.c.b16 %v352, %v350
    %v383 = vpack.c.b16 %v353, %v351
    %v384 = vpack.c.b16 %v356, %v354
    %v385 = vpack.c.b16 %v357, %v355
    %v386 = vpack.c.b16 %v360, %v358
    %v387 = vpack.c.b16 %v361, %v359
    %v388 = vpack.c.b16 %v362, %v362
    %v389 = vpack.c.b16 %v363, %v363
    %vm414 = vcmask 556032
    %v416 = vsel %vm414, %v257, 0
    %vm418 = vcmask 1041408
    %v420 = vsel %vm418, %v388, 0
    %v423 = vsel %vm418, %v389, 0
    %425 = vmatpush.bf16.msra.mxu0 %v378
    %426 = vmatpush.bf16.msra.mxu0 %v376
    %427 = vmatpush.bf16.msra.mxu0 %v374
    %428 = vmatpush.bf16.msra.mxu0 %v372
    %429 = vmatpush.bf16.msra.mxu0 %v370
    %430 = vmatpush.bf16.msra.mxu0 %v368
    %431 = vmatpush.bf16.msra.mxu0 %v366
    %432 = vmatpush.bf16.msra.mxu0 %v364
    %433 = vmatmul.bf16.gmra.mxu0 %v256
    %v434 = vpop.f32.mrf.mxu0
    %v435 = vadd.f32 %v285, %v434
    %v436 = vpop.f32.mrf.mxu0
    %437 = vdwg.mxu0
    %438 = vmatpush.bf16.msra.mxu0 0
    %439 = vmatpush.bf16.msra.mxu0 0
    %440 = vmatpush.bf16.msra.mxu0 0
    %441 = vmatpush.bf16.msra.mxu0 %v420
    %442 = vmatpush.bf16.msra.mxu0 %v386
    %443 = vmatpush.bf16.msra.mxu0 %v384
    %444 = vmatpush.bf16.msra.mxu0 %v382
    %445 = vmatpush.bf16.msra.mxu0 %v380
    %446 = vmatmul.bf16.gmra.mxu0 %v416
    %v447 = vpop.f32.mrf.mxu0
    %v448 = vadd.f32 %v435, %v447
    %v449 = vpop.f32.mrf.mxu0
    %450 = vdwg.mxu0
    %451 = vmatpush.bf16.msra.mxu0 %v379
    %452 = vmatpush.bf16.msra.mxu0 %v377
    %453 = vmatpush.bf16.msra.mxu0 %v375
    %454 = vmatpush.bf16.msra.mxu0 %v373
    %455 = vmatpush.bf16.msra.mxu0 %v371
    %456 = vmatpush.bf16.msra.mxu0 %v369
    %457 = vmatpush.bf16.msra.mxu0 %v367
    %458 = vmatpush.bf16.msra.mxu0 %v365
    %459 = vmatmul.bf16.gmra.mxu0 %v256
    %v460 = vpop.f32.mrf.mxu0
    %v461 = vadd.f32 %v286, %v460
    %v462 = vpop.f32.mrf.mxu0
    %463 = vdwg.mxu0
    %464 = vmatpush.bf16.msra.mxu0 0
    %465 = vmatpush.bf16.msra.mxu0 0
    %466 = vmatpush.bf16.msra.mxu0 0
    %467 = vmatpush.bf16.msra.mxu0 %v423
    %468 = vmatpush.bf16.msra.mxu0 %v387
    %469 = vmatpush.bf16.msra.mxu0 %v385
    %470 = vmatpush.bf16.msra.mxu0 %v383
    %471 = vmatpush.bf16.msra.mxu0 %v381
    %472 = vmatmul.bf16.gmra.mxu0 %v416
    %v473 = vpop.f32.mrf.mxu0
    %v474 = vadd.f32 %v461, %v473
    %v475 = vpop.f32.mrf.mxu0
    %476 = vdwg.mxu0
    %477 = vst [vmem:[%s9] sm:$0xff] %v448
    %478 = vst [vmem:[%s9 + $0x8] sm:$0xff] %v474
    // Predicated region
    $region30: #{sample_model_forward.2} parent=1 // pred_check
      _
    $region31: #{sample_model_forward.2} parent=1 // pred_check_branch
      %480 = sbr.rel (0) target = $region33
    $region32: #{sample_model_forward.2} parent=1 // pred_region
      _
    $region33: #{sample_model_forward.2} parent=1 // pred_fallthru
      _
    // Predicated region
    $region34: #{sample_model_forward.2} parent=1 // pred_check
      _
    $region35: #{sample_model_forward.2} parent=1 // pred_check_branch
      %482 = sbr.rel (0) target = $region37
    $region36: #{sample_model_forward.2} parent=1 // pred_region
      _
    $region37: #{sample_model_forward.2} parent=1 // pred_fallthru
      _

</llo_original>
